<compile_context>
chip_gen: v6e
topology: v6e:2x2x1
jax: 0.10.0
libtpu: 0.0.40
codegen_flags: <defaults>
</compile_context>

<pallas_src>
import jax
import jax.numpy as jnp
from jax.experimental import pallas as pl
from jax.experimental.pallas import tpu as pltpu


def _mul_kernel(scale_ref, x_ref, o_ref):
    # scale_ref: (1, C) lane-dense row
    # x_ref:     (C, HW)
    # o_ref:     (C, HW)
    scale_col = jnp.transpose(scale_ref[...])        # (C, 1) via XLU (idle slot)
    o_ref[...] = (scale_col * x_ref[...]).astype(o_ref.dtype)


def broadcast_mul(x508, x503):
    """x508: (1, C, 1, 1), x503: (1, C, H, W) -> (1, C, H, W) (promoted dtype)."""
    _, C, H, W = x503.shape
    HW = H * W

    # Match PyTorch type promotion for x508 * x503.
    out_dtype = jnp.result_type(x508.dtype, x503.dtype)

    scale = x508.reshape(1, C)      # lane-dense row, one contiguous tiny DMA
    x = x503.reshape(C, HW)         # free reshape of NCHW

    bytes_accessed = (
        C * HW * jnp.dtype(x503.dtype).itemsize     # read activations
        + C * jnp.dtype(x508.dtype).itemsize        # read per-channel scale
        + C * HW * jnp.dtype(out_dtype).itemsize    # write output
    )

    out = pl.pallas_call(
        _mul_kernel,
        out_shape=jax.ShapeDtypeStruct((C, HW), out_dtype),
        grid_spec=pltpu.PrefetchScalarGridSpec(
            num_scalar_prefetch=0,
            grid=(1,),  # single full-extent block: already at the HBM roofline
            in_specs=[
                pl.BlockSpec((1, C), lambda i: (0, 0)),
                pl.BlockSpec((C, HW), lambda i: (0, 0)),
            ],
            out_specs=pl.BlockSpec((C, HW), lambda i: (0, 0)),
        ),
        compiler_params=pltpu.CompilerParams(
            dimension_semantics=("arbitrary",),  # size-1 grid: semantics moot
        ),
        cost_estimate=pl.CostEstimate(
            flops=C * HW,
            transcendentals=0,
            bytes_accessed=bytes_accessed,
        ),
    )(scale, x)

    return out.reshape(1, C, H, W)


if __name__ == "__main__":
    key = jax.random.PRNGKey(0)
    k1, k2 = jax.random.split(key)

    # Small shapes consistent with the module's forward (module: 1x1344x14x14).
    C, H, W = 64, 14, 14
    x503 = jax.random.normal(k1, (1, C, H, W), dtype=jnp.float32)
    x508 = jax.random.normal(k2, (1, C, 1, 1), dtype=jnp.float32)

    out = jax.block_until_ready(broadcast_mul(x508, x503))

    expected = x508 * x503
    assert out.shape == expected.shape
    assert out.dtype == expected.dtype
    assert jnp.allclose(out, expected, atol=1e-6, rtol=1e-6)

    print("KERNEL_OK")
</pallas_src>

<mosaic_0001>
module attributes {stable_mosaic.version = 11 : i64} {
  func.func @_mul_kernel(%arg0: i32, %arg1: memref<1x64xf32, #tpu.memory_space<vmem>>, %arg2: memref<64x196xf32, #tpu.memory_space<vmem>>, %arg3: memref<64x196xf32, #tpu.memory_space<vmem>>) attributes {dimension_semantics = [#tpu.dimension_semantics<arbitrary>], iteration_bounds = array<i64: 1>, scalar_prefetch = 0 : i64, scratch_operands = 0 : i64, tpu.core_type = #tpu.core_type<tc>, window_params = [{pipeline_mode = #tpu.pipeline_mode<synchronous>, transform_indices = @transform_0, window_bounds = array<i64: 1, 64>}, {pipeline_mode = #tpu.pipeline_mode<synchronous>, transform_indices = @transform_1, window_bounds = array<i64: 64, 196>}, {pipeline_mode = #tpu.pipeline_mode<synchronous>, transform_indices = @transform_2, window_bounds = array<i64: 64, 196>}]} {
    %c0 = arith.constant 0 : index
    %c0_0 = arith.constant 0 : index
    %0 = vector.load %arg1[%c0, %c0_0] : memref<1x64xf32, #tpu.memory_space<vmem>>, vector<1x64xf32>
    %1 = tpu.transpose %0, [1, 0] : vector<1x64xf32> -> vector<64x1xf32>
    %c0_1 = arith.constant 0 : index
    %c0_2 = arith.constant 0 : index
    %2 = vector.load %arg2[%c0_1, %c0_2] : memref<64x196xf32, #tpu.memory_space<vmem>>, vector<64x196xf32>
    %3 = vector.broadcast %1 : vector<64x1xf32> to vector<64x196xf32>
    %4 = arith.mulf %3, %2 : vector<64x196xf32>
    %c0_3 = arith.constant 0 : index
    %c0_4 = arith.constant 0 : index
    %5 = vector.load %arg3[%c0_3, %c0_4] : memref<64x196xf32, #tpu.memory_space<vmem>>, vector<64x196xf32>
    tpu.vector_store %arg3[%c0_3, %c0_4], %4 {strides = array<i32>} : memref<64x196xf32, #tpu.memory_space<vmem>>, vector<64x196xf32>,
    return
  }
  func.func @transform_0(%arg0: i32) -> (i32, i32) {
    %c0_i32 = arith.constant 0 : i32
    %c0_i32_0 = arith.constant 0 : i32
    %c0_i32_1 = arith.constant 0 : i32
    return %c0_i32, %c0_i32_0 : i32, i32
  }
  func.func @transform_1(%arg0: i32) -> (i32, i32) {
    %c0_i32 = arith.constant 0 : i32
    %c0_i32_0 = arith.constant 0 : i32
    %c0_i32_1 = arith.constant 0 : i32
    return %c0_i32, %c0_i32_0 : i32, i32
  }
  func.func @transform_2(%arg0: i32) -> (i32, i32) {
    %c0_i32 = arith.constant 0 : i32
    %c0_i32_0 = arith.constant 0 : i32
    %c0_i32_1 = arith.constant 0 : i32
    return %c0_i32, %c0_i32_0 : i32, i32
  }
}

</mosaic_0001>

<llo_original>
// kernel: tpu_custom_call.1
$region0: #{tpu_custom_call.1}
  #allocation0 [shape = 'u32[]', space=smem, size = 0x4, offset = 0x4, fixed_abs, tag = 'smem constant byte address 0x4 - core index']
  #allocation1 [shape = 'u32[144,128]{1,0:T(1,128)}', space=vmem, size = 0x12000, scoped, tag = 'internal scratch']
  %s0 = inlined_call_operand.hbm [shape: f32[1,64], index: 0, kind: input, shape index: {}]
  %s1 = inlined_call_operand.hbm [shape: f32[64,196], index: 1, kind: input, shape index: {}]
  %s2 = inlined_call_operand.hbm [shape: f32[64,196], index: 2, kind: output, shape index: {}]
  %s3 = sld [smem:[#allocation0]]
  $region26: #{tpu_custom_call.1} parent=0
    _
  %s5 = ssub.s32 1, %s3
  %s6 = scalar_select 0, %s5, %s3
  $region1: #{tpu_custom_call.1} parent=0
    #allocation2 [shape = 'u8[512]{0}', space=vmem, size = 0x400, scoped, tag = 'input window, operand 0, single buffered']
    #allocation3 [shape = 's32[1]{0}', space=sflag, size = 0x4, scoped, tag = 'scoped memory for tpu_custom_call.1']
    #allocation4 [shape = 's32[1]{0}', space=sflag, size = 0x4, scoped, tag = 'scoped memory for tpu_custom_call.1']
    #allocation5 [shape = 'u8[65536]{0}', space=vmem, size = 0x10000, scoped, tag = 'input window, operand 1, single buffered']
    #allocation6 [shape = 's32[1]{0}', space=sflag, size = 0x4, scoped, tag = 'scoped memory for tpu_custom_call.1']
    #allocation7 [shape = 'u8[65536]{0}', space=vmem, size = 0x10000, scoped, tag = 'output window, operand 0, single buffered']
    %7 = vsyncpa [#allocation3], 0
    %8 = vsyncpa [#allocation6], 0
    %9 = vsyncpa [#allocation4], 0
    // Predicated region
    $region2: #{tpu_custom_call.1} parent=1 // pred_check
      _
    $region3: #{tpu_custom_call.1} parent=1 // pred_check_branch
      %11 = sbr.rel (0) target = $region5
    $region4: #{tpu_custom_call.1} parent=1 // pred_region
      %s13 = ssub.s32 16, 16
      %14 = vsyncadd [#allocation3], %s13
      %s16 = sshll.u32 [#allocation2], 4
      %s17 = int_to_ptr.vmem [resolvable:$true] %s16
      %19 = dma.hbm_to_vmem [thread:$0]  %s0, 16, %s17, [#allocation3]
    $region5: #{tpu_custom_call.1} parent=1 // pred_fallthru
      _
    // Predicated region
    $region6: #{tpu_custom_call.1} parent=1 // pred_check
      _
    $region7: #{tpu_custom_call.1} parent=1 // pred_check_branch
      %21 = sbr.rel (0) target = $region9
    $region8: #{tpu_custom_call.1} parent=1 // pred_region
      %s23 = ssub.s32 2048, 2048
      %24 = vsyncadd [#allocation6], %s23
      %s25 = sshll.u32 [#allocation5], 4
      %s26 = int_to_ptr.vmem [resolvable:$true] %s25
      %31 = dma.hbm_to_vmem [thread:$0]  %s1, 2048, %s26, [#allocation6], 256, 256, 16
    $region9: #{tpu_custom_call.1} parent=1 // pred_fallthru
      _
    // Predicated region
    $region10: #{tpu_custom_call.1} parent=1 // pred_check
      _
    $region11: #{tpu_custom_call.1} parent=1 // pred_check_branch
      %33 = sbr.rel (0) target = $region13
    $region12: #{tpu_custom_call.1} parent=1 // pred_region
      %34 = dma.done [#allocation3], 16
    $region13: #{tpu_custom_call.1} parent=1 // pred_fallthru
      _
    // Predicated region
    $region14: #{tpu_custom_call.1} parent=1 // pred_check
      _
    $region15: #{tpu_custom_call.1} parent=1 // pred_check_branch
      %36 = sbr.rel (0) target = $region17
    $region16: #{tpu_custom_call.1} parent=1 // pred_region
      %37 = dma.done [#allocation6], 2048
    $region17: #{tpu_custom_call.1} parent=1 // pred_fallthru
      _
    %v38 = vld [vmem:[#allocation2] sm:$0x1]
    %39 = vxpose.xlu0.b32.start [1/16] %v38, 128
    %40 = vxpose.xlu0.b32.cont [2/16] 0.0, 128
    %41 = vxpose.xlu0.b32.cont [3/16] 0.0, 128
    %42 = vxpose.xlu0.b32.cont [4/16] 0.0, 128
    %43 = vxpose.xlu0.b32.cont [5/16] 0.0, 128
    %44 = vxpose.xlu0.b32.cont [6/16] 0.0, 128
    %45 = vxpose.xlu0.b32.cont [7/16] 0.0, 128
    %46 = vxpose.xlu0.b32.cont [8/16] 0.0, 128
    %47 = vxpose.xlu0.b32.cont [9/16] 0.0, 128
    %48 = vxpose.xlu0.b32.cont [10/16] 0.0, 128
    %49 = vxpose.xlu0.b32.cont [11/16] 0.0, 128
    %50 = vxpose.xlu0.b32.cont [12/16] 0.0, 128
    %51 = vxpose.xlu0.b32.cont [13/16] 0.0, 128
    %52 = vxpose.xlu0.b32.cont [14/16] 0.0, 128
    %53 = vxpose.xlu0.b32.cont [15/16] 0.0, 128
    %54 = vxpose.xlu0.b32.end [16/16] 0.0, 128
    %v55 = vpop.trf.xlu0
    %v56 = vpop.trf.xlu0
    %v57 = vpop.trf.xlu0
    %v58 = vpop.trf.xlu0
    %v59 = vpop.trf.xlu0
    %v60 = vpop.trf.xlu0
    %v61 = vpop.trf.xlu0
    %v62 = vpop.trf.xlu0
    %v63 = vpop.trf.xlu0
    %v64 = vpop.trf.xlu0
    %v65 = vpop.trf.xlu0
    %v66 = vpop.trf.xlu0
    %v67 = vpop.trf.xlu0
    %v68 = vpop.trf.xlu0
    %v69 = vpop.trf.xlu0
    %v70 = vpop.trf.xlu0
    %v71 = vld [vmem:[#allocation5] sm:$0xff]
    %v72 = vld [vmem:[#allocation5 + $0x8] sm:$0xff]
    %v73 = vld [vmem:[#allocation5 + $0x10] sm:$0xff]
    %v74 = vld [vmem:[#allocation5 + $0x18] sm:$0xff]
    %v75 = vld [vmem:[#allocation5 + $0x20] sm:$0xff]
    %v76 = vld [vmem:[#allocation5 + $0x28] sm:$0xff]
    %v77 = vld [vmem:[#allocation5 + $0x30] sm:$0xff]
    %v78 = vld [vmem:[#allocation5 + $0x38] sm:$0xff]
    %v79 = vld [vmem:[#allocation5 + $0x40] sm:$0xff]
    %v80 = vld [vmem:[#allocation5 + $0x48] sm:$0xff]
    %v81 = vld [vmem:[#allocation5 + $0x50] sm:$0xff]
    %v82 = vld [vmem:[#allocation5 + $0x58] sm:$0xff]
    %v83 = vld [vmem:[#allocation5 + $0x60] sm:$0xff]
    %v84 = vld [vmem:[#allocation5 + $0x68] sm:$0xff]
    %v85 = vld [vmem:[#allocation5 + $0x70] sm:$0xff]
    %v86 = vld [vmem:[#allocation5 + $0x78] sm:$0xff]
    %88 = vset.pattern.permute.xlu0 0
    %89 = vperm.xlu0 %88, %v55
    %v90 = vpop.permute.xlu0 %89
    %93 = vset.pattern.permute.xlu0 0
    %94 = vperm.xlu0 %93, %v56
    %v95 = vpop.permute.xlu0 %94
    %98 = vset.pattern.permute.xlu0 0
    %99 = vperm.xlu0 %98, %v57
    %v100 = vpop.permute.xlu0 %99
    %103 = vset.pattern.permute.xlu0 0
    %104 = vperm.xlu0 %103, %v58
    %v105 = vpop.permute.xlu0 %104
    %108 = vset.pattern.permute.xlu0 0
    %109 = vperm.xlu0 %108, %v59
    %v110 = vpop.permute.xlu0 %109
    %113 = vset.pattern.permute.xlu0 0
    %114 = vperm.xlu0 %113, %v60
    %v115 = vpop.permute.xlu0 %114
    %118 = vset.pattern.permute.xlu0 0
    %119 = vperm.xlu0 %118, %v61
    %v120 = vpop.permute.xlu0 %119
    %123 = vset.pattern.permute.xlu0 0
    %124 = vperm.xlu0 %123, %v62
    %v125 = vpop.permute.xlu0 %124
    %v127 = vmul.f32 %v90, %v71
    %v128 = vmul.f32 %v90, %v72
    %v129 = vmul.f32 %v95, %v73
    %v130 = vmul.f32 %v95, %v74
    %v131 = vmul.f32 %v100, %v75
    %v132 = vmul.f32 %v100, %v76
    %v133 = vmul.f32 %v105, %v77
    %v134 = vmul.f32 %v105, %v78
    %v135 = vmul.f32 %v110, %v79
    %v136 = vmul.f32 %v110, %v80
    %v137 = vmul.f32 %v115, %v81
    %v138 = vmul.f32 %v115, %v82
    %v139 = vmul.f32 %v120, %v83
    %v140 = vmul.f32 %v120, %v84
    %v141 = vmul.f32 %v125, %v85
    %v142 = vmul.f32 %v125, %v86
    %143 = vst [vmem:[#allocation7] sm:$0xff] %v127
    %vm144 = vcmask 556032
    %145 = vst.msk [vmem:[#allocation7 + $0x8] sm:$0xff] %vm144, %v128
    %146 = vst [vmem:[#allocation7 + $0x10] sm:$0xff] %v129
    %147 = vst.msk [vmem:[#allocation7 + $0x18] sm:$0xff] %vm144, %v130
    %148 = vst [vmem:[#allocation7 + $0x20] sm:$0xff] %v131
    %149 = vst.msk [vmem:[#allocation7 + $0x28] sm:$0xff] %vm144, %v132
    %150 = vst [vmem:[#allocation7 + $0x30] sm:$0xff] %v133
    %151 = vst.msk [vmem:[#allocation7 + $0x38] sm:$0xff] %vm144, %v134
    %152 = vst [vmem:[#allocation7 + $0x40] sm:$0xff] %v135
    %153 = vst.msk [vmem:[#allocation7 + $0x48] sm:$0xff] %vm144, %v136
    %154 = vst [vmem:[#allocation7 + $0x50] sm:$0xff] %v137
    %155 = vst.msk [vmem:[#allocation7 + $0x58] sm:$0xff] %vm144, %v138
    %156 = vst [vmem:[#allocation7 + $0x60] sm:$0xff] %v139
    %157 = vst.msk [vmem:[#allocation7 + $0x68] sm:$0xff] %vm144, %v140
    %158 = vst [vmem:[#allocation7 + $0x70] sm:$0xff] %v141
    %159 = vst.msk [vmem:[#allocation7 + $0x78] sm:$0xff] %vm144, %v142
    // Predicated region
    $region18: #{tpu_custom_call.1} parent=1 // pred_check
      _
    $region19: #{tpu_custom_call.1} parent=1 // pred_check_branch
      %161 = sbr.rel (0) target = $region21
    $region20: #{tpu_custom_call.1} parent=1 // pred_region
      %s163 = ssub.s32 2048, 2048
      %164 = vsyncadd [#allocation4], %s163
      %s165 = sshll.u32 [#allocation7], 4
      %s166 = int_to_ptr.vmem [resolvable:$true] %s165
      %171 = dma.vmem_to_hbm [thread:$0]  %s166, 2048, %s2, [#allocation4], 256, 256, 16
    $region21: #{tpu_custom_call.1} parent=1 // pred_fallthru
      _
    // Predicated region
    $region22: #{tpu_custom_call.1} parent=1 // pred_check
      _
    $region23: #{tpu_custom_call.1} parent=1 // pred_check_branch
      %173 = sbr.rel (0) target = $region25
    $region24: #{tpu_custom_call.1} parent=1 // pred_region
      %174 = dma.done [#allocation4], 2048
    $region25: #{tpu_custom_call.1} parent=1 // pred_fallthru
      _
    %175 = vsyncpa [#allocation3], 1
    %176 = vsyncpa [#allocation6], 1
    %177 = vsyncpa [#allocation4], 1

</llo_original>
